<compile_context>
chip_gen: v7x
topology: tpu7x:2x2x1
jax: 0.10.0
libtpu: 0.0.40
codegen_flags: <defaults>
</compile_context>

<pallas_src>
import jax
import jax.numpy as jnp
from jax.experimental import pallas as pl
from jax.experimental.pallas import tpu as pltpu


LANE = 128          # final logits padded out to this many columns (lane-dense)
_NEG_BIG = -1e30    # bias for padded logit columns -> exp(pad - m) == 0 exactly


def _round_up(x, m):
    return (x + m - 1) // m * m


def multimodal_head_kernel(cls_ref, st_ref, wc_ref, wst_ref, c_ref,
                           w2_ref, b2_ref, o_ref):
    f32, bf16 = jnp.float32, jnp.bfloat16

    # h_pre = cls @ Wc' + [sentiment | topic] @ Wst' + c
    # (folded form of cls@A_c + sp@A_s + tp@A_t + attn@A_a + b1; the length-1
    #  softmax of CrossModalAttention is exactly 1.0, so attn == value(sp+tp))
    acc = jnp.dot(cls_ref[...].astype(bf16), wc_ref[...],
                  preferred_element_type=f32)
    acc = acc + jnp.dot(st_ref[...].astype(bf16), wst_ref[...],
                        preferred_element_type=f32)
    h = jnp.maximum(acc + c_ref[...], 0.0)          # ReLU; Dropout = identity (eval)

    # Second classifier Linear against a lane-dense (H, 128) weight; padded
    # columns carry bias -1e30 so they contribute exactly 0 to the softmax.
    logits = jnp.dot(h.astype(bf16), w2_ref[...],
                     preferred_element_type=f32) + b2_ref[...]

    m = jnp.max(logits, axis=-1, keepdims=True)
    e = jnp.exp(logits - m)
    denom = jnp.sum(e, axis=-1, keepdims=True)
    o_ref[...] = (e / denom).astype(o_ref.dtype)    # exact division: rows sum to 1


def multimodal_classifier_head(cls_emb, sentiment, topic, fp, *, block_b=256):
    """fp = folded params from fold_params()."""
    B, Dh = cls_emb.shape
    wc, wst, c, w2p, b2p = fp["wc"], fp["wst"], fp["c"], fp["w2p"], fp["b2p"]
    H = wc.shape[1]
    Cp = w2p.shape[1]
    C = fp["n_classes"]

    # Pack the two tiny modality inputs into one operand (single DMA stream).
    st = jnp.concatenate([sentiment, topic], axis=-1).astype(jnp.float32)
    Dst = st.shape[1]

    # Batch tiling: sublane-aligned tiles; with large batches block_b=256 fills
    # the 256-wide MXU on v6e/v7x and yields >=2 grid steps for v7x's 2 TCs.
    bb = min(block_b, _round_up(B, 8))
    Bp = _round_up(B, bb)
    if Bp != B:
        cls_emb = jnp.pad(cls_emb, ((0, Bp - B), (0, 0)))
        st = jnp.pad(st, ((0, Bp - B), (0, 0)))

    batch_spec = lambda d: pl.BlockSpec((bb, d), lambda b: (b, 0))
    resident = lambda r, cc: pl.BlockSpec((r, cc), lambda b: (0, 0))

    out = pl.pallas_call(
        multimodal_head_kernel,
        out_shape=jax.ShapeDtypeStruct((Bp, Cp), jnp.float32),
        grid=(Bp // bb,),
        in_specs=[
            batch_spec(Dh),        # cls_emb (bf16 straight from the BERT graph)
            batch_spec(Dst),       # packed [sentiment | topic]
            resident(Dh, H),       # folded cls -> hidden weight            (bf16)
            resident(Dst, H),      # folded (sentiment|topic) -> hidden wt. (bf16)
            resident(1, H),        # folded hidden bias                     (f32)
            resident(H, Cp),       # classifier Linear2 weight, lane-padded (bf16)
            resident(1, Cp),       # classifier Linear2 bias, pad = -1e30   (f32)
        ],
        out_specs=batch_spec(Cp),
        compiler_params=pltpu.CompilerParams(
            dimension_semantics=("parallel",),       # batch tiles independent
            vmem_limit_bytes=32 * 1024 * 1024,
        ),
    )(cls_emb, st, wc, wst, c, w2p, b2p)
    return out[:B, :C]


def init_raw_params(key, dh, ds, dt, hidden, n_classes):
    """nn.Linear-style init, weights pre-transposed to (in, out), all float32."""
    def linear(k, fan_in, fan_out):
        kw, kb = jax.random.split(k)
        bound = fan_in ** -0.5
        w_t = jax.random.uniform(kw, (fan_in, fan_out), jnp.float32, -bound, bound)
        b = jax.random.uniform(kb, (1, fan_out), jnp.float32, -bound, bound)
        return w_t, b

    ks = jax.random.split(key, 7)
    ws_t, bs = linear(ks[0], ds, dh)            # sentiment_projection
    wt_t, bt = linear(ks[1], dt, dh)            # topic_projection
    wq_t, bq = linear(ks[2], dh, dh)            # attn.query (dead: softmax over len-1)
    wk_t, bk = linear(ks[3], dh, dh)            # attn.key   (dead: softmax over len-1)
    wv_t, bv = linear(ks[4], dh, dh)            # attn.value
    w1_t, b1 = linear(ks[5], 4 * dh, hidden)    # classifier[0]
    w2_t, b2 = linear(ks[6], hidden, n_classes) # classifier[3]
    return dict(ws_t=ws_t, bs=bs, wt_t=wt_t, bt=bt, wq_t=wq_t, bq=bq,
                wk_t=wk_t, bk=bk, wv_t=wv_t, bv=bv, w1_t=w1_t, b1=b1,
                w2_t=w2_t, b2=b2)


def fold_params(p, dh, n_classes):
    """Fold Ws/Wt/Wv (and the identity attention) into W1, in f32 on host.

    h_pre = cls@A_c + sp@A_s + tp@A_t + ((sp+tp)@Wv + bv)@A_a + b1
          = cls@A_c + sentiment@(Ws(A_s+Wv A_a)) + topic@(Wt(A_t+Wv A_a))
            + [b1 + bv@A_a + bs@(A_s+Wv A_a) + bt@(A_t+Wv A_a)]
    """
    bf16 = jnp.bfloat16
    a_c = p["w1_t"][0 * dh:1 * dh]              # cls row-block of W1^T
    a_s = p["w1_t"][1 * dh:2 * dh]              # sentiment_proj row-block
    a_t = p["w1_t"][2 * dh:3 * dh]              # topic_proj row-block
    a_a = p["w1_t"][3 * dh:4 * dh]              # attention-output row-block

    m = p["wv_t"] @ a_a                         # (Dh, H)
    ws_f = p["ws_t"] @ (a_s + m)                # (Ds, H)
    wt_f = p["wt_t"] @ (a_t + m)                # (Dt, H)
    c = (p["b1"] + p["bv"] @ a_a
         + p["bs"] @ (a_s + m) + p["bt"] @ (a_t + m))          # (1, H)

    wst = jnp.concatenate([ws_f, wt_f], axis=0)                # (Ds+Dt, H)

    cp = _round_up(n_classes, LANE)
    w2p = jnp.pad(p["w2_t"], ((0, 0), (0, cp - n_classes)))                   # zeros
    b2p = jnp.pad(p["b2"], ((0, 0), (0, cp - n_classes)),
                  constant_values=_NEG_BIG)                                    # -1e30

    return dict(wc=a_c.astype(bf16), wst=wst.astype(bf16), c=c,
                w2p=w2p.astype(bf16), b2p=b2p, n_classes=n_classes)


def reference(cls_emb, sentiment, topic, p):
    """Full module math in float32 (q/k + length-1 softmax kept, nothing folded)."""
    cls_emb = cls_emb.astype(jnp.float32)
    sp = sentiment @ p["ws_t"] + p["bs"]
    tp = topic @ p["wt_t"] + p["bt"]
    y = sp + tp

    # CrossModalAttention exactly as written in the PyTorch module.
    q = cls_emb @ p["wq_t"] + p["bq"]
    k = y @ p["wk_t"] + p["bk"]
    v = y @ p["wv_t"] + p["bv"]
    scale = cls_emb.shape[1] ** (-0.5)
    logits = jnp.sum(q * k, axis=-1, keepdims=True) * scale   # (B, 1)
    attn = jax.nn.softmax(logits, axis=-1)                    # == 1.0 exactly
    attn_out = attn * v

    fused = jnp.concatenate([cls_emb, sp, tp, attn_out], axis=-1)
    h = jax.nn.relu(fused @ p["w1_t"] + p["b1"])
    out_logits = h @ p["w2_t"] + p["b2"]                      # Dropout: identity (eval)
    return jax.nn.softmax(out_logits, axis=-1)


if __name__ == "__main__":
    # Small but hardware-aligned shapes: Dh/H multiples of 128, batch multiple
    # of 8; senti_dim=2 and num_classes=2 come from the module.
    B, Dh, Ds, Dt, H, C = 8, 128, 2, 16, 256, 2

    key = jax.random.PRNGKey(0)
    k_cls, k_s, k_t, k_p = jax.random.split(key, 4)
    # TODO(synk): BertModel itself is an external pretrained network; its
    # pooler_output (cls_emb, already bf16 inside the BERT graph) is taken as a
    # kernel input instead of running BERT here.
    cls_emb = jax.random.normal(k_cls, (B, Dh), jnp.float32).astype(jnp.bfloat16)
    sentiment = jax.random.normal(k_s, (B, Ds), jnp.float32)
    topic = jax.random.normal(k_t, (B, Dt), jnp.float32)

    raw = init_raw_params(k_p, Dh, Ds, Dt, H, C)
    folded = fold_params(raw, Dh, C)

    out = multimodal_classifier_head(cls_emb, sentiment, topic, folded)
    out = jax.block_until_ready(out)

    ref = reference(cls_emb, sentiment, topic, raw)
    assert out.shape == (B, C), out.shape
    assert bool(jnp.all(jnp.isfinite(out))), "non-finite output"
    assert bool(jnp.allclose(jnp.sum(out, axis=-1), 1.0, atol=1e-3)), "rows must sum to 1"
    assert bool(jnp.allclose(out, ref, atol=1e-2, rtol=1e-2)), "mismatch vs reference"
    print("KERNEL_OK")
</pallas_src>

<mosaic_0001>
module attributes {stable_mosaic.version = 11 : i64} {
  func.func @multimodal_head_kernel(%arg0: i32, %arg1: memref<8x128xbf16, #tpu.memory_space<vmem>>, %arg2: memref<8x18xf32, #tpu.memory_space<vmem>>, %arg3: memref<128x256xbf16, #tpu.memory_space<vmem>>, %arg4: memref<18x256xbf16, #tpu.memory_space<vmem>>, %arg5: memref<1x256xf32, #tpu.memory_space<vmem>>, %arg6: memref<256x128xbf16, #tpu.memory_space<vmem>>, %arg7: memref<1x128xf32, #tpu.memory_space<vmem>>, %arg8: memref<8x128xf32, #tpu.memory_space<vmem>>) attributes {dimension_semantics = [#tpu.dimension_semantics<parallel>], iteration_bounds = array<i64: 1>, scalar_prefetch = 0 : i64, scratch_operands = 0 : i64, tpu.core_type = #tpu.core_type<tc>, window_params = [{transform_indices = @transform_0, window_bounds = array<i64: 8, 128>}, {transform_indices = @transform_1, window_bounds = array<i64: 8, 18>}, {pipeline_mode = #tpu.pipeline_mode<synchronous>, transform_indices = @transform_2, window_bounds = array<i64: 128, 256>}, {pipeline_mode = #tpu.pipeline_mode<synchronous>, transform_indices = @transform_3, window_bounds = array<i64: 18, 256>}, {pipeline_mode = #tpu.pipeline_mode<synchronous>, transform_indices = @transform_4, window_bounds = array<i64: 1, 256>}, {pipeline_mode = #tpu.pipeline_mode<synchronous>, transform_indices = @transform_5, window_bounds = array<i64: 256, 128>}, {pipeline_mode = #tpu.pipeline_mode<synchronous>, transform_indices = @transform_6, window_bounds = array<i64: 1, 128>}, {transform_indices = @transform_7, window_bounds = array<i64: 8, 128>}]} {
    %c0 = arith.constant 0 : index
    %c0_0 = arith.constant 0 : index
    %0 = vector.load %arg1[%c0, %c0_0] : memref<8x128xbf16, #tpu.memory_space<vmem>>, vector<8x128xbf16>
    %c0_1 = arith.constant 0 : index
    %c0_2 = arith.constant 0 : index
    %1 = vector.load %arg3[%c0_1, %c0_2] : memref<128x256xbf16, #tpu.memory_space<vmem>>, vector<128x256xbf16>
    %cst = arith.constant dense<0.000000e+00> : vector<8x256xf32>
    %2 = tpu.matmul %0, %1, %cst {dimension_numbers = #tpu.dot_dimension_numbers<[1], [0], [0], [1], [0, 0, 1, 1], [], []>} : vector<8x128xbf16>, vector<128x256xbf16>, vector<8x256xf32> -> vector<8x256xf32>
    %c0_3 = arith.constant 0 : index
    %c0_4 = arith.constant 0 : index
    %3 = vector.load %arg2[%c0_3, %c0_4] : memref<8x18xf32, #tpu.memory_space<vmem>>, vector<8x18xf32>
    %4 = arith.truncf %3 : vector<8x18xf32> to vector<8x18xbf16>
    %c0_5 = arith.constant 0 : index
    %c0_6 = arith.constant 0 : index
    %5 = vector.load %arg4[%c0_5, %c0_6] : memref<18x256xbf16, #tpu.memory_space<vmem>>, vector<18x256xbf16>
    %cst_7 = arith.constant dense<0.000000e+00> : vector<8x256xf32>
    %6 = tpu.matmul %4, %5, %cst_7 {dimension_numbers = #tpu.dot_dimension_numbers<[1], [0], [0], [1], [0, 0, 1, 1], [], []>} : vector<8x18xbf16>, vector<18x256xbf16>, vector<8x256xf32> -> vector<8x256xf32>
    %7 = arith.addf %2, %6 : vector<8x256xf32>
    %c0_8 = arith.constant 0 : index
    %c0_9 = arith.constant 0 : index
    %8 = vector.load %arg5[%c0_8, %c0_9] : memref<1x256xf32, #tpu.memory_space<vmem>>, vector<1x256xf32>
    %9 = vector.broadcast %8 : vector<1x256xf32> to vector<8x256xf32>
    %10 = arith.addf %7, %9 : vector<8x256xf32>
    %cst_10 = arith.constant 0.000000e+00 : f32
    %11 = vector.broadcast %cst_10 : f32 to vector<8x256xf32>
    %12 = arith.maximumf %10, %11 : vector<8x256xf32>
    %13 = arith.truncf %12 : vector<8x256xf32> to vector<8x256xbf16>
    %c0_11 = arith.constant 0 : index
    %c0_12 = arith.constant 0 : index
    %14 = vector.load %arg6[%c0_11, %c0_12] : memref<256x128xbf16, #tpu.memory_space<vmem>>, vector<256x128xbf16>
    %cst_13 = arith.constant dense<0.000000e+00> : vector<8x128xf32>
    %15 = tpu.matmul %13, %14, %cst_13 {dimension_numbers = #tpu.dot_dimension_numbers<[1], [0], [0], [1], [0, 0, 1, 1], [], []>} : vector<8x256xbf16>, vector<256x128xbf16>, vector<8x128xf32> -> vector<8x128xf32>
    %c0_14 = arith.constant 0 : index
    %c0_15 = arith.constant 0 : index
    %16 = vector.load %arg7[%c0_14, %c0_15] : memref<1x128xf32, #tpu.memory_space<vmem>>, vector<1x128xf32>
    %17 = vector.broadcast %16 : vector<1x128xf32> to vector<8x128xf32>
    %18 = arith.addf %15, %17 : vector<8x128xf32>
    %cst_16 = arith.constant dense<0xFF800000> : vector<8xf32>
    %19 = vector.multi_reduction <maximumf>, %18, %cst_16 [1] : vector<8x128xf32> to vector<8xf32>
    %20 = vector.shape_cast %19 : vector<8xf32> to vector<8x1xf32>
    %21 = vector.broadcast %20 : vector<8x1xf32> to vector<8x128xf32>
    %22 = arith.subf %18, %21 : vector<8x128xf32>
    %23 = math.exp %22 : vector<8x128xf32>
    %cst_17 = arith.constant dense<0.000000e+00> : vector<8xf32>
    %24 = vector.multi_reduction <add>, %23, %cst_17 [1] : vector<8x128xf32> to vector<8xf32>
    %25 = vector.shape_cast %24 : vector<8xf32> to vector<8x1xf32>
    %26 = vector.broadcast %25 : vector<8x1xf32> to vector<8x128xf32>
    %27 = arith.divf %23, %26 : vector<8x128xf32>
    %c0_18 = arith.constant 0 : index
    %c0_19 = arith.constant 0 : index
    %28 = vector.load %arg8[%c0_18, %c0_19] : memref<8x128xf32, #tpu.memory_space<vmem>>, vector<8x128xf32>
    tpu.vector_store %arg8[%c0_18, %c0_19], %27 {strides = array<i32>} : memref<8x128xf32, #tpu.memory_space<vmem>>, vector<8x128xf32>,
    return
  }
  func.func @transform_0(%arg0: i32) -> (i32, i32) {
    %c0_i32 = arith.constant 0 : i32
    %c0_i32_0 = arith.constant 0 : i32
    return %arg0, %c0_i32 : i32, i32
  }
  func.func @transform_1(%arg0: i32) -> (i32, i32) {
    %c0_i32 = arith.constant 0 : i32
    %c0_i32_0 = arith.constant 0 : i32
    return %arg0, %c0_i32 : i32, i32
  }
  func.func @transform_2(%arg0: i32) -> (i32, i32) {
    %c0_i32 = arith.constant 0 : i32
    %c0_i32_0 = arith.constant 0 : i32
    %c0_i32_1 = arith.constant 0 : i32
    return %c0_i32, %c0_i32_0 : i32, i32
  }
  func.func @transform_3(%arg0: i32) -> (i32, i32) {
    %c0_i32 = arith.constant 0 : i32
    %c0_i32_0 = arith.constant 0 : i32
    %c0_i32_1 = arith.constant 0 : i32
    return %c0_i32, %c0_i32_0 : i32, i32
  }
  func.func @transform_4(%arg0: i32) -> (i32, i32) {
    %c0_i32 = arith.constant 0 : i32
    %c0_i32_0 = arith.constant 0 : i32
    %c0_i32_1 = arith.constant 0 : i32
    return %c0_i32, %c0_i32_0 : i32, i32
  }
  func.func @transform_5(%arg0: i32) -> (i32, i32) {
    %c0_i32 = arith.constant 0 : i32
    %c0_i32_0 = arith.constant 0 : i32
    %c0_i32_1 = arith.constant 0 : i32
    return %c0_i32, %c0_i32_0 : i32, i32
  }
  func.func @transform_6(%arg0: i32) -> (i32, i32) {
    %c0_i32 = arith.constant 0 : i32
    %c0_i32_0 = arith.constant 0 : i32
    %c0_i32_1 = arith.constant 0 : i32
    return %c0_i32, %c0_i32_0 : i32, i32
  }
  func.func @transform_7(%arg0: i32) -> (i32, i32) {
    %c0_i32 = arith.constant 0 : i32
    %c0_i32_0 = arith.constant 0 : i32
    return %arg0, %c0_i32 : i32, i32
  }
}

</mosaic_0001>

<llo_original>
// kernel: tpu_custom_call.1
$region0: #{tpu_custom_call.1}
  #allocation0 [shape = 'u32[]', space=smem, size = 0x4, offset = 0x4, fixed_abs, tag = 'smem constant byte address 0x4 - core index']
  #allocation1 [shape = 'u32[144,128]{1,0:T(1,128)}', space=vmem, size = 0x12000, scoped, tag = 'internal scratch']
  %s0 = inlined_call_operand.hbm [shape: bf16[8,128], index: 0, kind: input, shape index: {}]
  %s1 = inlined_call_operand.hbm [shape: f32[8,18], index: 1, kind: input, shape index: {}]
  %s2 = inlined_call_operand.hbm [shape: bf16[128,256], index: 2, kind: input, shape index: {}]
  %s3 = inlined_call_operand.hbm [shape: bf16[18,256], index: 3, kind: input, shape index: {}]
  %s4 = inlined_call_operand.vmem [shape: f32[1,256], index: 4, kind: input, shape index: {}]
  %s5 = inlined_call_operand.hbm [shape: bf16[256,128], index: 5, kind: input, shape index: {}]
  %s6 = inlined_call_operand.vmem [shape: f32[1,128], index: 6, kind: input, shape index: {}]
  %s7 = inlined_call_operand.hbm [shape: f32[8,128], index: 7, kind: output, shape index: {}]
  %s8 = sld [smem:[#allocation0]]
  $region58: #{tpu_custom_call.1} parent=0
    _
  %s10 = ssub.s32 1, %s8
  %s11 = scalar_select 0, %s10, %s8
  $region1: #{tpu_custom_call.1} parent=0
    #allocation2 [shape = 'u8[2048]{0}', space=vmem, size = 0x800, scoped, tag = 'input window, operand 0, single buffered']
    #allocation3 [shape = 's32[1]{0}', space=sflag, size = 0x4, scoped, tag = 'scoped memory for tpu_custom_call.1']
    #allocation4 [shape = 's32[1]{0}', space=sflag, size = 0x4, scoped, tag = 'scoped memory for tpu_custom_call.1']
    #allocation5 [shape = 'u8[4096]{0}', space=vmem, size = 0x1000, scoped, tag = 'input window, operand 1, single buffered']
    #allocation6 [shape = 's32[1]{0}', space=sflag, size = 0x4, scoped, tag = 'scoped memory for tpu_custom_call.1']
    #allocation7 [shape = 'u8[65536]{0}', space=vmem, size = 0x10000, scoped, tag = 'input window, operand 2, single buffered']
    #allocation8 [shape = 'u8[12288]{0}', space=vmem, size = 0x3000, scoped, tag = 'input window, operand 3, single buffered']
    #allocation9 [shape = 's32[1]{0}', space=sflag, size = 0x4, scoped, tag = 'scoped memory for tpu_custom_call.1']
    #allocation10 [shape = 'u8[65536]{0}', space=vmem, size = 0x10000, scoped, tag = 'input window, operand 5, single buffered']
    #allocation11 [shape = 'u8[4096]{0}', space=vmem, size = 0x1000, scoped, tag = 'output window, operand 0, single buffered']
    %12 = vsyncpa [#allocation3], 0
    %13 = vsyncpa [#allocation6], 0
    %14 = vsyncpa [#allocation9], 0
    %15 = vsyncpa [#allocation4], 0
    // Predicated region
    $region2: #{tpu_custom_call.1} parent=1 // pred_check
      _
    $region3: #{tpu_custom_call.1} parent=1 // pred_check_branch
      %17 = sbr.rel (0) target = $region5
    $region4: #{tpu_custom_call.1} parent=1 // pred_region
      %s19 = ssub.s32 64, 64
      %20 = vsyncadd [#allocation3], %s19
      %s22 = sshll.u32 [#allocation2], 4
      %s23 = int_to_ptr.vmem [resolvable:$true] %s22
      %25 = dma.hbm_to_vmem [thread:$0]  %s0, 64, %s23, [#allocation3]
    $region5: #{tpu_custom_call.1} parent=1 // pred_fallthru
      _
    // Predicated region
    $region6: #{tpu_custom_call.1} parent=1 // pred_check
      _
    $region7: #{tpu_custom_call.1} parent=1 // pred_check_branch
      %27 = sbr.rel (0) target = $region9
    $region8: #{tpu_custom_call.1} parent=1 // pred_region
      %s29 = ssub.s32 128, 128
      %30 = vsyncadd [#allocation6], %s29
      %s32 = sshll.u32 [#allocation5], 4
      %s33 = int_to_ptr.vmem [resolvable:$true] %s32
      %35 = dma.hbm_to_vmem [thread:$0]  %s1, 128, %s33, [#allocation6]
    $region9: #{tpu_custom_call.1} parent=1 // pred_fallthru
      _
    // Predicated region
    $region10: #{tpu_custom_call.1} parent=1 // pred_check
      _
    $region11: #{tpu_custom_call.1} parent=1 // pred_check_branch
      %37 = sbr.rel (0) target = $region13
    $region12: #{tpu_custom_call.1} parent=1 // pred_region
      %s39 = ssub.s32 2048, 2048
      %40 = vsyncadd [#allocation6], %s39
      %s41 = sshll.u32 [#allocation7], 4
      %s42 = int_to_ptr.vmem [resolvable:$true] %s41
      %47 = dma.hbm_to_vmem [thread:$0]  %s2, 2048, %s42, [#allocation6], 128, 128, 8
    $region13: #{tpu_custom_call.1} parent=1 // pred_fallthru
      _
    // Predicated region
    $region14: #{tpu_custom_call.1} parent=1 // pred_check
      _
    $region15: #{tpu_custom_call.1} parent=1 // pred_check_branch
      %49 = sbr.rel (0) target = $region17
    $region16: #{tpu_custom_call.1} parent=1 // pred_region
      %s51 = ssub.s32 384, 384
      %52 = vsyncadd [#allocation9], %s51
      %s53 = sshll.u32 [#allocation8], 4
      %s54 = int_to_ptr.vmem [resolvable:$true] %s53
      %59 = dma.hbm_to_vmem [thread:$0]  %s3, 384, %s54, [#allocation9], 128, 128, 8
    $region17: #{tpu_custom_call.1} parent=1 // pred_fallthru
      _
    // Predicated region
    $region18: #{tpu_custom_call.1} parent=1 // pred_check
      _
    $region19: #{tpu_custom_call.1} parent=1 // pred_check_branch
      %61 = sbr.rel (0) target = $region21
    $region20: #{tpu_custom_call.1} parent=1 // pred_region
      _
    $region21: #{tpu_custom_call.1} parent=1 // pred_fallthru
      _
    // Predicated region
    $region22: #{tpu_custom_call.1} parent=1 // pred_check
      _
    $region23: #{tpu_custom_call.1} parent=1 // pred_check_branch
      %63 = sbr.rel (0) target = $region25
    $region24: #{tpu_custom_call.1} parent=1 // pred_region
      %s65 = ssub.s32 2048, 2048
      %66 = vsyncadd [#allocation9], %s65
      %s67 = sshll.u32 [#allocation10], 4
      %s68 = int_to_ptr.vmem [resolvable:$true] %s67
      %73 = dma.hbm_to_vmem [thread:$0]  %s5, 2048, %s68, [#allocation9], 64, 64, 4
    $region25: #{tpu_custom_call.1} parent=1 // pred_fallthru
      _
    // Predicated region
    $region26: #{tpu_custom_call.1} parent=1 // pred_check
      _
    $region27: #{tpu_custom_call.1} parent=1 // pred_check_branch
      %75 = sbr.rel (0) target = $region29
    $region28: #{tpu_custom_call.1} parent=1 // pred_region
      _
    $region29: #{tpu_custom_call.1} parent=1 // pred_fallthru
      _
    // Predicated region
    $region30: #{tpu_custom_call.1} parent=1 // pred_check
      _
    $region31: #{tpu_custom_call.1} parent=1 // pred_check_branch
      %77 = sbr.rel (0) target = $region33
    $region32: #{tpu_custom_call.1} parent=1 // pred_region
      %78 = dma.done [#allocation3], 64
    $region33: #{tpu_custom_call.1} parent=1 // pred_fallthru
      _
    // Predicated region
    $region34: #{tpu_custom_call.1} parent=1 // pred_check
      _
    $region35: #{tpu_custom_call.1} parent=1 // pred_check_branch
      %80 = sbr.rel (0) target = $region37
    $region36: #{tpu_custom_call.1} parent=1 // pred_region
      %81 = dma.done [#allocation6], 128
    $region37: #{tpu_custom_call.1} parent=1 // pred_fallthru
      _
    // Predicated region
    $region38: #{tpu_custom_call.1} parent=1 // pred_check
      _
    $region39: #{tpu_custom_call.1} parent=1 // pred_check_branch
      %83 = sbr.rel (0) target = $region41
    $region40: #{tpu_custom_call.1} parent=1 // pred_region
      %84 = dma.done [#allocation6], 2048
    $region41: #{tpu_custom_call.1} parent=1 // pred_fallthru
      _
    // Predicated region
    $region42: #{tpu_custom_call.1} parent=1 // pred_check
      _
    $region43: #{tpu_custom_call.1} parent=1 // pred_check_branch
      %86 = sbr.rel (0) target = $region45
    $region44: #{tpu_custom_call.1} parent=1 // pred_region
      %87 = dma.done [#allocation9], 384
    $region45: #{tpu_custom_call.1} parent=1 // pred_fallthru
      _
    // Predicated region
    $region46: #{tpu_custom_call.1} parent=1 // pred_check
      _
    $region47: #{tpu_custom_call.1} parent=1 // pred_check_branch
      %89 = sbr.rel (0) target = $region49
    $region48: #{tpu_custom_call.1} parent=1 // pred_region
      %90 = dma.done [#allocation9], 2048
    $region49: #{tpu_custom_call.1} parent=1 // pred_fallthru
      _
    %v92 = vld [vmem:[#allocation2] sm:$0xf]
    %v93 = vld [vmem:[#allocation7] sm:$0xff]
    %v94 = vld [vmem:[#allocation7 + $0x8] sm:$0xff]
    %v95 = vld [vmem:[#allocation7 + $0x10] sm:$0xff]
    %v96 = vld [vmem:[#allocation7 + $0x18] sm:$0xff]
    %v97 = vld [vmem:[#allocation7 + $0x20] sm:$0xff]
    %v98 = vld [vmem:[#allocation7 + $0x28] sm:$0xff]
    %v99 = vld [vmem:[#allocation7 + $0x30] sm:$0xff]
    %v100 = vld [vmem:[#allocation7 + $0x38] sm:$0xff]
    %v101 = vld [vmem:[#allocation7 + $0x40] sm:$0xff]
    %v102 = vld [vmem:[#allocation7 + $0x48] sm:$0xff]
    %v103 = vld [vmem:[#allocation7 + $0x50] sm:$0xff]
    %v104 = vld [vmem:[#allocation7 + $0x58] sm:$0xff]
    %v105 = vld [vmem:[#allocation7 + $0x60] sm:$0xff]
    %v106 = vld [vmem:[#allocation7 + $0x68] sm:$0xff]
    %v107 = vld [vmem:[#allocation7 + $0x70] sm:$0xff]
    %v108 = vld [vmem:[#allocation7 + $0x78] sm:$0xff]
    %v109 = vld [vmem:[#allocation5] sm:$0xff]
    %v110 = vpack.c.bf16 %v109, %v109
    %v111 = vld [vmem:[#allocation8] sm:$0xff]
    %v112 = vld [vmem:[#allocation8 + $0x8] sm:$0xff]
    %v113 = vld [vmem:[#allocation8 + $0x10] sm:$0x11]
    %v117 = vunpack.c.l.b16 %v111
    %v118 = vunpack.c.h.b16 %v111
    %v119 = vunpack.c.l.b16 %v112
    %v120 = vunpack.c.h.b16 %v112
    %v121 = vunpack.c.l.b16 %v113
    %v122 = vunpack.c.h.b16 %v113
    %v123 = vpack.c.b16 %v119, %v117
    %v124 = vpack.c.b16 %v120, %v118
    %v125 = vpack.c.b16 %v121, %v121
    %v126 = vpack.c.b16 %v122, %v122
    %vm129 = vcmask 146432
    %v131 = vsel %vm129, %v110, 0
    %vm133 = vcmask 1040384
    %v135 = vsel %vm133, %v125, 0
    %v138 = vsel %vm133, %v126, 0
    %140 = vmatprep.subr.bf16.mxu0 %v124
    %141 = vmatpush1.bf16.msra.mxu0 %v123
    %142 = vmatprep.subr.bf16.mxu0 %v138
    %143 = vmatpush1.bf16.msra.mxu0 %v135
    %144 = vmatprep.subr.bf16.mxu0 0
    %145 = vmatpush1.bf16.msra.mxu0 0
    %146 = vmatprep.subr.bf16.mxu0 0
    %147 = vmatpush1.bf16.msra.mxu0 0
    %148 = vmatprep.subr.bf16.mxu0 0
    %149 = vmatpush1.bf16.msra.mxu0 0
    %150 = vmatprep.subr.bf16.mxu0 0
    %151 = vmatpush1.bf16.msra.mxu0 0
    %152 = vmatprep.subr.bf16.mxu0 0
    %153 = vmatpush1.bf16.msra.mxu0 0
    %154 = vmatprep.subr.bf16.mxu0 0
    %155 = vmatpush1.bf16.msra.mxu0 0
    %156 = vmatprep.subr.bf16.mxu0 0
    %157 = vmatpush1.bf16.msra.mxu0 0
    %158 = vmatprep.subr.bf16.mxu0 0
    %159 = vmatpush1.bf16.msra.mxu0 0
    %160 = vmatprep.subr.bf16.mxu0 0
    %161 = vmatpush1.bf16.msra.mxu0 0
    %162 = vmatprep.subr.bf16.mxu0 0
    %163 = vmatpush1.bf16.msra.mxu0 0
    %164 = vmatprep.subr.bf16.mxu0 0
    %165 = vmatpush1.bf16.msra.mxu0 0
    %166 = vmatprep.subr.bf16.mxu0 0
    %167 = vmatpush1.bf16.msra.mxu0 0
    %168 = vmatprep.subr.bf16.mxu0 0
    %169 = vmatpush1.bf16.msra.mxu0 0
    %170 = vmatprep.subr.bf16.mxu0 0
    %171 = vmatpush1.bf16.msra.mxu0 0
    %172 = vmatprep.mubr.bf16.mxu0 0
    %173 = vmatmul.mubr.bf16.gmra.mrb[0].mxu0 %v131
    %v174 = vpop.f32.mrb[0].mxu0
    %v175 = vadd.f32 0.0, %v174
    %v176 = vpop.f32.mrb[0].mxu0
    %v177 = vadd.f32 0.0, %v176
    %v178 = vpop.f32.mrb[0].mxu0
    %v179 = vpop.f32.mrb[0].mxu0
    %180 = vdwg.mxu0
    %v197 = vunpack.c.l.b16 %v93
    %v198 = vunpack.c.h.b16 %v93
    %v199 = vunpack.c.l.b16 %v94
    %v200 = vunpack.c.h.b16 %v94
    %v201 = vunpack.c.l.b16 %v95
    %v202 = vunpack.c.h.b16 %v95
    %v203 = vunpack.c.l.b16 %v96
    %v204 = vunpack.c.h.b16 %v96
    %v205 = vunpack.c.l.b16 %v97
    %v206 = vunpack.c.h.b16 %v97
    %v207 = vunpack.c.l.b16 %v98
    %v208 = vunpack.c.h.b16 %v98
    %v209 = vunpack.c.l.b16 %v99
    %v210 = vunpack.c.h.b16 %v99
    %v211 = vunpack.c.l.b16 %v100
    %v212 = vunpack.c.h.b16 %v100
    %v213 = vunpack.c.l.b16 %v101
    %v214 = vunpack.c.h.b16 %v101
    %v215 = vunpack.c.l.b16 %v102
    %v216 = vunpack.c.h.b16 %v102
    %v217 = vunpack.c.l.b16 %v103
    %v218 = vunpack.c.h.b16 %v103
    %v219 = vunpack.c.l.b16 %v104
    %v220 = vunpack.c.h.b16 %v104
    %v221 = vunpack.c.l.b16 %v105
    %v222 = vunpack.c.h.b16 %v105
    %v223 = vunpack.c.l.b16 %v106
    %v224 = vunpack.c.h.b16 %v106
    %v225 = vunpack.c.l.b16 %v107
    %v226 = vunpack.c.h.b16 %v107
    %v227 = vunpack.c.l.b16 %v108
    %v228 = vunpack.c.h.b16 %v108
    %v229 = vpack.c.b16 %v199, %v197
    %v230 = vpack.c.b16 %v200, %v198
    %v231 = vpack.c.b16 %v203, %v201
    %v232 = vpack.c.b16 %v204, %v202
    %v233 = vpack.c.b16 %v207, %v205
    %v234 = vpack.c.b16 %v208, %v206
    %v235 = vpack.c.b16 %v211, %v209
    %v236 = vpack.c.b16 %v212, %v210
    %v237 = vpack.c.b16 %v215, %v213
    %v238 = vpack.c.b16 %v216, %v214
    %v239 = vpack.c.b16 %v219, %v217
    %v240 = vpack.c.b16 %v220, %v218
    %v241 = vpack.c.b16 %v223, %v221
    %v242 = vpack.c.b16 %v224, %v222
    %v243 = vpack.c.b16 %v227, %v225
    %v244 = vpack.c.b16 %v228, %v226
    %261 = vmatprep.subr.bf16.mxu0 %v230
    %262 = vmatpush1.bf16.msra.mxu0 %v229
    %263 = vmatprep.subr.bf16.mxu0 %v232
    %264 = vmatpush1.bf16.msra.mxu0 %v231
    %265 = vmatprep.subr.bf16.mxu0 %v234
    %266 = vmatpush1.bf16.msra.mxu0 %v233
    %267 = vmatprep.subr.bf16.mxu0 %v236
    %268 = vmatpush1.bf16.msra.mxu0 %v235
    %269 = vmatprep.subr.bf16.mxu0 %v238
    %270 = vmatpush1.bf16.msra.mxu0 %v237
    %271 = vmatprep.subr.bf16.mxu0 %v240
    %272 = vmatpush1.bf16.msra.mxu0 %v239
    %273 = vmatprep.subr.bf16.mxu0 %v242
    %274 = vmatpush1.bf16.msra.mxu0 %v241
    %275 = vmatprep.subr.bf16.mxu0 %v244
    %276 = vmatpush1.bf16.msra.mxu0 %v243
    %277 = vmatprep.subr.bf16.mxu0 0
    %278 = vmatpush1.bf16.msra.mxu0 0
    %279 = vmatprep.subr.bf16.mxu0 0
    %280 = vmatpush1.bf16.msra.mxu0 0
    %281 = vmatprep.subr.bf16.mxu0 0
    %282 = vmatpush1.bf16.msra.mxu0 0
    %283 = vmatprep.subr.bf16.mxu0 0
    %284 = vmatpush1.bf16.msra.mxu0 0
    %285 = vmatprep.subr.bf16.mxu0 0
    %286 = vmatpush1.bf16.msra.mxu0 0
    %287 = vmatprep.subr.bf16.mxu0 0
    %288 = vmatpush1.bf16.msra.mxu0 0
    %289 = vmatprep.subr.bf16.mxu0 0
    %290 = vmatpush1.bf16.msra.mxu0 0
    %291 = vmatprep.subr.bf16.mxu0 0
    %292 = vmatpush1.bf16.msra.mxu0 0
    %293 = vmatprep.mubr.bf16.mxu0 0
    %294 = vmatmul.mubr.bf16.gmra.mrb[0].mxu0 %v92
    %v295 = vpop.f32.mrb[0].mxu0
    %v296 = vadd.f32 %v175, %v295
    %v297 = vpop.f32.mrb[0].mxu0
    %v298 = vadd.f32 %v177, %v297
    %v299 = vpop.f32.mrb[0].mxu0
    %v300 = vpop.f32.mrb[0].mxu0
    %301 = vdwg.mxu0
    %v302 = vld [vmem:[%s4] sm:$0x3]
    %v304 = vlaneseq
    %v305 = vshrl.u32 %v304, 7
    %v306 = vsub.s32 0, %v305
    %v307 = vrot.slane %v302, %v306
    %v308 = vlaneseq
    %v309 = vshrl.u32 %v308, 7
    %v310 = vsub.s32 1, %v309
    %v311 = vrot.slane %v302, %v310
    %v314 = vadd.f32 %v296, %v307
    %v315 = vadd.f32 %v298, %v311
    %v316 = vmax.f32 %v314, 0.0
    %v317 = vmax.f32 %v315, 0.0
    %v318 = vpack.c.bf16 %v316, %v316
    %v319 = vpack.c.bf16 %v317, %v317
    %v320 = vld [vmem:[#allocation10] sm:$0xf]
    %v321 = vld [vmem:[#allocation10 + $0x4] sm:$0xf]
    %v322 = vld [vmem:[#allocation10 + $0x8] sm:$0xf]
    %v323 = vld [vmem:[#allocation10 + $0xc] sm:$0xf]
    %v324 = vld [vmem:[#allocation10 + $0x10] sm:$0xf]
    %v325 = vld [vmem:[#allocation10 + $0x14] sm:$0xf]
    %v326 = vld [vmem:[#allocation10 + $0x18] sm:$0xf]
    %v327 = vld [vmem:[#allocation10 + $0x1c] sm:$0xf]
    %v328 = vld [vmem:[#allocation10 + $0x20] sm:$0xf]
    %v329 = vld [vmem:[#allocation10 + $0x24] sm:$0xf]
    %v330 = vld [vmem:[#allocation10 + $0x28] sm:$0xf]
    %v331 = vld [vmem:[#allocation10 + $0x2c] sm:$0xf]
    %v332 = vld [vmem:[#allocation10 + $0x30] sm:$0xf]
    %v333 = vld [vmem:[#allocation10 + $0x34] sm:$0xf]
    %v334 = vld [vmem:[#allocation10 + $0x38] sm:$0xf]
    %v335 = vld [vmem:[#allocation10 + $0x3c] sm:$0xf]
    %v336 = vld [vmem:[#allocation10 + $0x40] sm:$0xf]
    %v337 = vld [vmem:[#allocation10 + $0x44] sm:$0xf]
    %v338 = vld [vmem:[#allocation10 + $0x48] sm:$0xf]
    %v339 = vld [vmem:[#allocation10 + $0x4c] sm:$0xf]
    %v340 = vld [vmem:[#allocation10 + $0x50] sm:$0xf]
    %v341 = vld [vmem:[#allocation10 + $0x54] sm:$0xf]
    %v342 = vld [vmem:[#allocation10 + $0x58] sm:$0xf]
    %v343 = vld [vmem:[#allocation10 + $0x5c] sm:$0xf]
    %v344 = vld [vmem:[#allocation10 + $0x60] sm:$0xf]
    %v345 = vld [vmem:[#allocation10 + $0x64] sm:$0xf]
    %v346 = vld [vmem:[#allocation10 + $0x68] sm:$0xf]
    %v347 = vld [vmem:[#allocation10 + $0x6c] sm:$0xf]
    %v348 = vld [vmem:[#allocation10 + $0x70] sm:$0xf]
    %v349 = vld [vmem:[#allocation10 + $0x74] sm:$0xf]
    %v350 = vld [vmem:[#allocation10 + $0x78] sm:$0xf]
    %v351 = vld [vmem:[#allocation10 + $0x7c] sm:$0xf]
    %v352 = vld [vmem:[%s6] sm:$0x1]
    %v354 = vlaneseq
    %v355 = vshrl.u32 %v354, 7
    %v356 = vsub.s32 0, %v355
    %v357 = vrot.slane %v352, %v356
    %v391 = vunpack.c.l.b16 %v320
    %v392 = vunpack.c.l.b16 %v321
    %v393 = vunpack.c.l.b16 %v322
    %v394 = vunpack.c.l.b16 %v323
    %v395 = vunpack.c.l.b16 %v324
    %v396 = vunpack.c.l.b16 %v325
    %v397 = vunpack.c.l.b16 %v326
    %v398 = vunpack.c.l.b16 %v327
    %v399 = vunpack.c.l.b16 %v328
    %v400 = vunpack.c.l.b16 %v329
    %v401 = vunpack.c.l.b16 %v330
    %v402 = vunpack.c.l.b16 %v331
    %v403 = vunpack.c.l.b16 %v332
    %v404 = vunpack.c.l.b16 %v333
    %v405 = vunpack.c.l.b16 %v334
    %v406 = vunpack.c.l.b16 %v335
    %v407 = vunpack.c.l.b16 %v336
    %v408 = vunpack.c.l.b16 %v337
    %v409 = vunpack.c.l.b16 %v338
    %v410 = vunpack.c.l.b16 %v339
    %v411 = vunpack.c.l.b16 %v340
    %v412 = vunpack.c.l.b16 %v341
    %v413 = vunpack.c.l.b16 %v342
    %v414 = vunpack.c.l.b16 %v343
    %v415 = vunpack.c.l.b16 %v344
    %v416 = vunpack.c.l.b16 %v345
    %v417 = vunpack.c.l.b16 %v346
    %v418 = vunpack.c.l.b16 %v347
    %v419 = vunpack.c.l.b16 %v348
    %v420 = vunpack.c.l.b16 %v349
    %v421 = vunpack.c.l.b16 %v350
    %v422 = vunpack.c.l.b16 %v351
    %v423 = vpack.c.b16 %v392, %v391
    %v424 = vpack.c.b16 %v394, %v393
    %v425 = vpack.c.b16 %v396, %v395
    %v426 = vpack.c.b16 %v398, %v397
    %v427 = vpack.c.b16 %v400, %v399
    %v428 = vpack.c.b16 %v402, %v401
    %v429 = vpack.c.b16 %v404, %v403
    %v430 = vpack.c.b16 %v406, %v405
    %v431 = vpack.c.b16 %v408, %v407
    %v432 = vpack.c.b16 %v410, %v409
    %v433 = vpack.c.b16 %v412, %v411
    %v434 = vpack.c.b16 %v414, %v413
    %v435 = vpack.c.b16 %v416, %v415
    %v436 = vpack.c.b16 %v418, %v417
    %v437 = vpack.c.b16 %v420, %v419
    %v438 = vpack.c.b16 %v422, %v421
    %455 = vmatprep.subr.bf16.mxu0 0
    %456 = vmatpush1.bf16.msra.mxu0 %v423
    %457 = vmatprep.subr.bf16.mxu0 0
    %458 = vmatpush1.bf16.msra.mxu0 %v424
    %459 = vmatprep.subr.bf16.mxu0 0
    %460 = vmatpush1.bf16.msra.mxu0 %v425
    %461 = vmatprep.subr.bf16.mxu0 0
    %462 = vmatpush1.bf16.msra.mxu0 %v426
    %463 = vmatprep.subr.bf16.mxu0 0
    %464 = vmatpush1.bf16.msra.mxu0 %v427
    %465 = vmatprep.subr.bf16.mxu0 0
    %466 = vmatpush1.bf16.msra.mxu0 %v428
    %467 = vmatprep.subr.bf16.mxu0 0
    %468 = vmatpush1.bf16.msra.mxu0 %v429
    %469 = vmatprep.subr.bf16.mxu0 0
    %470 = vmatpush1.bf16.msra.mxu0 %v430
    %471 = vmatprep.subr.bf16.mxu0 0
    %472 = vmatpush1.bf16.msra.mxu0 %v431
    %473 = vmatprep.subr.bf16.mxu0 0
    %474 = vmatpush1.bf16.msra.mxu0 %v432
    %475 = vmatprep.subr.bf16.mxu0 0
    %476 = vmatpush1.bf16.msra.mxu0 %v433
    %477 = vmatprep.subr.bf16.mxu0 0
    %478 = vmatpush1.bf16.msra.mxu0 %v434
    %479 = vmatprep.subr.bf16.mxu0 0
    %480 = vmatpush1.bf16.msra.mxu0 %v435
    %481 = vmatprep.subr.bf16.mxu0 0
    %482 = vmatpush1.bf16.msra.mxu0 %v436
    %483 = vmatprep.subr.bf16.mxu0 0
    %484 = vmatpush1.bf16.msra.mxu0 %v437
    %485 = vmatprep.subr.bf16.mxu0 0
    %486 = vmatpush1.bf16.msra.mxu0 %v438
    %487 = vmatprep.mubr.bf16.mxu0 %v319
    %488 = vmatmul.mubr.bf16.gmra.mrb[0].mxu0 %v318
    %v489 = vpop.f32.mrb[0].mxu0
    %v490 = vadd.f32 %v357, %v489
    %v491 = vpop.f32.mrb[0].mxu0
    %v492 = vpop.f32.mrb[0].mxu0
    %v493 = vpop.f32.mrb[0].mxu0
    %494 = vdwg.mxu0
    %495 = vmax.xlane.f32.xlu0 %v490
    %v496 = vpop.xlane.xlu0 %495
    %v497 = vsub.f32 %v490, %v496
    %v498 = vmul.f32 %v497, 1.442695
    %v499 = vpow.pop %v498
    %500 = vadd.xlane.f32.xlu0 %v499
    %v501 = vpop.xlane.xlu0 %500
    %v502 = vrcp.pop %v501
    %v503 = vmul.f32 %v499, %v502
    %504 = vst [vmem:[#allocation11] sm:$0xff] %v503
    // Predicated region
    $region50: #{tpu_custom_call.1} parent=1 // pred_check
      _
    $region51: #{tpu_custom_call.1} parent=1 // pred_check_branch
      %506 = sbr.rel (0) target = $region53
    $region52: #{tpu_custom_call.1} parent=1 // pred_region
      %s508 = ssub.s32 128, 128
      %509 = vsyncadd [#allocation4], %s508
      %s511 = sshll.u32 [#allocation11], 4
      %s512 = int_to_ptr.vmem [resolvable:$true] %s511
      %514 = dma.vmem_to_hbm [thread:$0]  %s512, 128, %s7, [#allocation4]
    $region53: #{tpu_custom_call.1} parent=1 // pred_fallthru
      _
    // Predicated region
    $region54: #{tpu_custom_call.1} parent=1 // pred_check
      _
    $region55: #{tpu_custom_call.1} parent=1 // pred_check_branch
      %516 = sbr.rel (0) target = $region57
    $region56: #{tpu_custom_call.1} parent=1 // pred_region
      %517 = dma.done [#allocation4], 128
    $region57: #{tpu_custom_call.1} parent=1 // pred_fallthru
      _
    %518 = vsyncpa [#allocation3], 1
    %519 = vsyncpa [#allocation6], 1
    %520 = vsyncpa [#allocation9], 1
    %521 = vsyncpa [#allocation4], 1

</llo_original>
